<compile_context>
chip_gen: v5e
topology: v5e:2x2
jax: 0.10.0
libtpu: 0.0.40
codegen_flags: <defaults>
</compile_context>

<pallas_src>
import functools

import jax
import jax.numpy as jnp
from jax.experimental import pallas as pl
from jax.experimental.pallas import tpu as pltpu


def _round_up(v, n):
    return (v + n - 1) // n * n


def _vmem_cap_bytes():
    """Usable VMEM budget: generation-aware when queryable (v5e/v6e: 128 MiB,
    v7x: 64 MiB per TensorCore), conservative 64 MiB fallback otherwise."""
    try:
        cap = int(pltpu.get_tpu_info().vmem_capacity_bytes)
        if cap > 0:
            return max(32 * 1024 * 1024, cap - 16 * 1024 * 1024)
    except Exception:
        pass
    return 64 * 1024 * 1024


def _choose_row_tile(BN, Hp, want, cap_bytes):
    """Largest row tile (multiple of 8, <= row count) whose per-step VMEM
    footprint fits comfortably inside the budget."""
    if want is None:
        want = 2048 if Hp <= 512 else 1024
    want = max(8, (want // 8) * 8)
    tile = min(want, _round_up(BN, 8))
    # Double-buffered bf16 weights + f32 biases (constant index maps).
    fixed = 2 * (3 * Hp * Hp * 2 + 2 * Hp * 4)
    # Per row: x + noise (double-buffered bf16), output (double-buffered f32),
    # two f32 intermediates + slack.
    per_row = Hp * (2 * 2 + 2 * 2 + 2 * 4 + 3 * 4)
    while tile > 8 and fixed + tile * per_row > int(cap_bytes * 0.8):
        tile = max(8, ((tile // 2) // 8) * 8)
    return tile


def _hallucinator_kernel(x_ref, n_ref, w1x_ref, w1n_ref, b1_ref, w2_ref,
                         b2_ref, o_ref):
    # Layer 1:  cat(x, noise) @ W1  ==  x @ W1x + noise @ W1n  (f32 acc).
    h = jnp.dot(x_ref[...], w1x_ref[...], preferred_element_type=jnp.float32)
    h += jnp.dot(n_ref[...], w1n_ref[...], preferred_element_type=jnp.float32)
    h = jnp.maximum(h + b1_ref[...], 0.0)
    # Layer 2 + ReLU.
    o = jnp.dot(h.astype(w2_ref.dtype), w2_ref[...],
                preferred_element_type=jnp.float32)
    o = jnp.maximum(o + b2_ref[...], 0.0)
    o_ref[...] = o.astype(o_ref.dtype)


@functools.partial(
    jax.jit, static_argnames=("row_tile", "m", "out_dtype", "vmem_limit"))
def _hallucinator_call(x_pad, noise, w1x, w1n, b1, w2, b2, *,
                       row_tile, m, out_dtype, vmem_limit):
    BNp, Hp = x_pad.shape
    n_x_blocks = BNp // row_tile

    # x block index is independent of j (the inner copy axis) -> the tile
    # stays VMEM-resident across all m hallucinated copies.
    x_spec = pl.BlockSpec((row_tile, Hp), lambda i, j: (i, 0))
    # noise / output live in the (m * BNp, Hp) layout: copy j, x-block i.
    copy_spec = pl.BlockSpec((row_tile, Hp),
                             lambda i, j: (j * n_x_blocks + i, 0))
    w_spec = pl.BlockSpec((Hp, Hp), lambda i, j: (0, 0))
    b_spec = pl.BlockSpec((1, Hp), lambda i, j: (0, 0))

    return pl.pallas_call(
        _hallucinator_kernel,
        out_shape=jax.ShapeDtypeStruct((m * BNp, Hp), out_dtype),
        grid=(n_x_blocks, m),
        in_specs=[x_spec, copy_spec, w_spec, w_spec, b_spec, w_spec, b_spec],
        out_specs=copy_spec,
        compiler_params=pltpu.CompilerParams(
            dimension_semantics=("parallel", "arbitrary"),
            vmem_limit_bytes=int(vmem_limit),
        ),
    )(x_pad, noise, w1x, w1n, b1, w2, b2)


def ifi_hallucinator_forward(x, kparams, m, noise_seed, *,
                             row_tile=None, out_dtype=jnp.float32,
                             return_noise=False):
    """Full IFIHallucinator.forward.  x: (B, N, H) f32 -> (m*B, N, H)."""
    B, N, H = x.shape
    BN = B * N
    Hp = kparams["w1x"].shape[1]          # feature dim padded to 128 lanes
    cdt = kparams["w1x"].dtype            # MXU compute dtype (bf16)

    cap = _vmem_cap_bytes()
    tile = _choose_row_tile(BN, Hp, row_tile, cap)
    BNp = _round_up(BN, tile)

    # bf16 x, padded with jnp.pad (rows to a tile multiple, features to Hp).
    x_pad = jnp.pad(x.reshape(BN, H).astype(cdt),
                    ((0, BNp - BN), (0, Hp - H)))
    # U[0,1) noise for all m copies, generated directly in the compute dtype.
    noise = jax.random.uniform(jax.random.PRNGKey(noise_seed),
                               (m * BNp, Hp), dtype=cdt)

    y_pad = _hallucinator_call(x_pad, noise,
                               kparams["w1x"], kparams["w1n"], kparams["b1"],
                               kparams["w2"], kparams["b2"],
                               row_tile=tile, m=m, out_dtype=out_dtype,
                               vmem_limit=cap)

    y = y_pad.reshape(m, BNp, Hp)[:, :BN, :H].reshape(m * B, N, H)
    if return_noise:
        nz = noise.reshape(m, BNp, Hp)[:, :BN, :H].reshape(m * B, N, H)
        return y, nz
    return y


def init_params(key, hid_dim, dtype=jnp.float32):
    """nn.Linear-style init U(-1/sqrt(fan_in), 1/sqrt(fan_in)), stored (in, out)."""
    k1, k2, k3, k4 = jax.random.split(key, 4)
    fan1, fan2 = 2 * hid_dim, hid_dim
    lim1 = 1.0 / float(fan1) ** 0.5
    lim2 = 1.0 / float(fan2) ** 0.5
    return {
        "w1": jax.random.uniform(k1, (fan1, hid_dim), dtype, -lim1, lim1),
        "b1": jax.random.uniform(k2, (hid_dim,), dtype, -lim1, lim1),
        "w2": jax.random.uniform(k3, (fan2, hid_dim), dtype, -lim2, lim2),
        "b2": jax.random.uniform(k4, (hid_dim,), dtype, -lim2, lim2),
    }


def prepare_kernel_params(params, hid_dim, compute_dtype=jnp.bfloat16):
    """Split W1 into seed/noise halves, zero-pad features to a multiple of 128
    lanes, cast weights to the MXU compute dtype (biases stay f32)."""
    H = hid_dim
    Hp = _round_up(max(H, 128), 128)

    def pad_w(w):
        return jnp.pad(w.astype(compute_dtype), ((0, Hp - H), (0, Hp - H)))

    def pad_b(b):
        return jnp.pad(b.astype(jnp.float32), (0, Hp - H)).reshape(1, Hp)

    return {
        "w1x": pad_w(params["w1"][:H]),     # seed half of W1
        "w1n": pad_w(params["w1"][H:]),     # noise half of W1
        "b1": pad_b(params["b1"]),
        "w2": pad_w(params["w2"]),
        "b2": pad_b(params["b2"]),
    }


if __name__ == "__main__":
    # Small shapes consistent with the module's forward: x (B, N, hid_dim), m copies.
    B, N, HID, M = 2, 8, 32, 3
    NOISE_SEED = 1234

    root = jax.random.PRNGKey(0)
    kx, kp = jax.random.split(root, 2)

    x = jax.random.normal(kx, (B, N, HID), dtype=jnp.float32)
    params = init_params(kp, HID)
    kparams = prepare_kernel_params(params, HID)

    y, noise = ifi_hallucinator_forward(x, kparams, M, NOISE_SEED,
                                        return_noise=True)
    y, noise = jax.block_until_ready((y, noise))
    assert y.shape == (M * B, N, HID), y.shape
    assert noise.shape == (M * B, N, HID), noise.shape
    assert bool(jnp.all((noise >= 0.0) & (noise < 1.0)))

    # Pure-JAX reference mirroring the kernel's casts (bf16 inputs, f32 acc).
    f32, bf = jnp.float32, jnp.bfloat16
    w1x = kparams["w1x"][:HID, :HID].astype(f32)
    w1n = kparams["w1n"][:HID, :HID].astype(f32)
    w2 = kparams["w2"][:HID, :HID].astype(f32)
    b1 = kparams["b1"][0, :HID]
    b2 = kparams["b2"][0, :HID]
    seed = jnp.tile(x, (M, 1, 1)).astype(bf).astype(f32)
    nz = noise.astype(f32)                      # noise already bf16-quantized
    h = jnp.maximum(seed @ w1x + nz @ w1n + b1, 0.0)
    ref = jnp.maximum(h.astype(bf).astype(f32) @ w2 + b2, 0.0)
    assert bool(jnp.allclose(y, ref, atol=1e-2, rtol=1e-2)), \
        float(jnp.max(jnp.abs(y - ref)))

    # Production path (no noise returned) — reuses the same compiled kernel.
    y2 = ifi_hallucinator_forward(x, kparams, M, NOISE_SEED)
    y2 = jax.block_until_ready(y2)
    assert y2.shape == (M * B, N, HID)
    assert bool(jnp.all(y2 >= 0.0)) and bool(jnp.all(jnp.isfinite(y2)))

    print("KERNEL_OK")
</pallas_src>

<mosaic_0001>
module attributes {stable_mosaic.version = 11 : i64} {
  func.func @_hallucinator_kernel(%arg0: i32, %arg1: i32, %arg2: memref<16x128xbf16, #tpu.memory_space<vmem>>, %arg3: memref<16x128xbf16, #tpu.memory_space<vmem>>, %arg4: memref<128x128xbf16, #tpu.memory_space<vmem>>, %arg5: memref<128x128xbf16, #tpu.memory_space<vmem>>, %arg6: memref<1x128xf32, #tpu.memory_space<vmem>>, %arg7: memref<128x128xbf16, #tpu.memory_space<vmem>>, %arg8: memref<1x128xf32, #tpu.memory_space<vmem>>, %arg9: memref<16x128xf32, #tpu.memory_space<vmem>>) attributes {dimension_semantics = [#tpu.dimension_semantics<parallel>, #tpu.dimension_semantics<arbitrary>], iteration_bounds = array<i64: 1, 3>, scalar_prefetch = 0 : i64, scratch_operands = 0 : i64, tpu.core_type = #tpu.core_type<tc>, window_params = [{transform_indices = @transform_0, window_bounds = array<i64: 16, 128>}, {transform_indices = @transform_1, window_bounds = array<i64: 16, 128>}, {pipeline_mode = #tpu.pipeline_mode<synchronous>, transform_indices = @transform_2, window_bounds = array<i64: 128, 128>}, {pipeline_mode = #tpu.pipeline_mode<synchronous>, transform_indices = @transform_3, window_bounds = array<i64: 128, 128>}, {pipeline_mode = #tpu.pipeline_mode<synchronous>, transform_indices = @transform_4, window_bounds = array<i64: 1, 128>}, {pipeline_mode = #tpu.pipeline_mode<synchronous>, transform_indices = @transform_5, window_bounds = array<i64: 128, 128>}, {pipeline_mode = #tpu.pipeline_mode<synchronous>, transform_indices = @transform_6, window_bounds = array<i64: 1, 128>}, {transform_indices = @transform_7, window_bounds = array<i64: 16, 128>}]} {
    %c0 = arith.constant 0 : index
    %c0_0 = arith.constant 0 : index
    %0 = vector.load %arg2[%c0, %c0_0] : memref<16x128xbf16, #tpu.memory_space<vmem>>, vector<16x128xbf16>
    %c0_1 = arith.constant 0 : index
    %c0_2 = arith.constant 0 : index
    %1 = vector.load %arg4[%c0_1, %c0_2] : memref<128x128xbf16, #tpu.memory_space<vmem>>, vector<128x128xbf16>
    %cst = arith.constant dense<0.000000e+00> : vector<16x128xf32>
    %2 = tpu.matmul %0, %1, %cst {dimension_numbers = #tpu.dot_dimension_numbers<[1], [0], [0], [1], [0, 0, 1, 1], [], []>} : vector<16x128xbf16>, vector<128x128xbf16>, vector<16x128xf32> -> vector<16x128xf32>
    %c0_3 = arith.constant 0 : index
    %c0_4 = arith.constant 0 : index
    %3 = vector.load %arg3[%c0_3, %c0_4] : memref<16x128xbf16, #tpu.memory_space<vmem>>, vector<16x128xbf16>
    %c0_5 = arith.constant 0 : index
    %c0_6 = arith.constant 0 : index
    %4 = vector.load %arg5[%c0_5, %c0_6] : memref<128x128xbf16, #tpu.memory_space<vmem>>, vector<128x128xbf16>
    %cst_7 = arith.constant dense<0.000000e+00> : vector<16x128xf32>
    %5 = tpu.matmul %3, %4, %cst_7 {dimension_numbers = #tpu.dot_dimension_numbers<[1], [0], [0], [1], [0, 0, 1, 1], [], []>} : vector<16x128xbf16>, vector<128x128xbf16>, vector<16x128xf32> -> vector<16x128xf32>
    %6 = arith.addf %2, %5 : vector<16x128xf32>
    %c0_8 = arith.constant 0 : index
    %c0_9 = arith.constant 0 : index
    %7 = vector.load %arg6[%c0_8, %c0_9] : memref<1x128xf32, #tpu.memory_space<vmem>>, vector<1x128xf32>
    %8 = vector.broadcast %7 : vector<1x128xf32> to vector<16x128xf32>
    %9 = arith.addf %6, %8 : vector<16x128xf32>
    %cst_10 = arith.constant 0.000000e+00 : f32
    %10 = vector.broadcast %cst_10 : f32 to vector<16x128xf32>
    %11 = arith.maximumf %9, %10 : vector<16x128xf32>
    %12 = arith.truncf %11 : vector<16x128xf32> to vector<16x128xbf16>
    %c0_11 = arith.constant 0 : index
    %c0_12 = arith.constant 0 : index
    %13 = vector.load %arg7[%c0_11, %c0_12] : memref<128x128xbf16, #tpu.memory_space<vmem>>, vector<128x128xbf16>
    %cst_13 = arith.constant dense<0.000000e+00> : vector<16x128xf32>
    %14 = tpu.matmul %12, %13, %cst_13 {dimension_numbers = #tpu.dot_dimension_numbers<[1], [0], [0], [1], [0, 0, 1, 1], [], []>} : vector<16x128xbf16>, vector<128x128xbf16>, vector<16x128xf32> -> vector<16x128xf32>
    %c0_14 = arith.constant 0 : index
    %c0_15 = arith.constant 0 : index
    %15 = vector.load %arg8[%c0_14, %c0_15] : memref<1x128xf32, #tpu.memory_space<vmem>>, vector<1x128xf32>
    %16 = vector.broadcast %15 : vector<1x128xf32> to vector<16x128xf32>
    %17 = arith.addf %14, %16 : vector<16x128xf32>
    %cst_16 = arith.constant 0.000000e+00 : f32
    %18 = vector.broadcast %cst_16 : f32 to vector<16x128xf32>
    %19 = arith.maximumf %17, %18 : vector<16x128xf32>
    %c0_17 = arith.constant 0 : index
    %c0_18 = arith.constant 0 : index
    %20 = vector.load %arg9[%c0_17, %c0_18] : memref<16x128xf32, #tpu.memory_space<vmem>>, vector<16x128xf32>
    tpu.vector_store %arg9[%c0_17, %c0_18], %19 {strides = array<i32>} : memref<16x128xf32, #tpu.memory_space<vmem>>, vector<16x128xf32>,
    return
  }
  func.func @transform_0(%arg0: i32, %arg1: i32) -> (i32, i32) {
    %c0_i32 = arith.constant 0 : i32
    %c0_i32_0 = arith.constant 0 : i32
    return %arg0, %c0_i32 : i32, i32
  }
  func.func @transform_1(%arg0: i32, %arg1: i32) -> (i32, i32) {
    %c1_i32 = arith.constant 1 : i32
    %0 = arith.muli %arg1, %c1_i32 : i32
    %1 = arith.addi %0, %arg0 : i32
    %c0_i32 = arith.constant 0 : i32
    %c0_i32_0 = arith.constant 0 : i32
    return %1, %c0_i32 : i32, i32
  }
  func.func @transform_2(%arg0: i32, %arg1: i32) -> (i32, i32) {
    %c0_i32 = arith.constant 0 : i32
    %c0_i32_0 = arith.constant 0 : i32
    %c0_i32_1 = arith.constant 0 : i32
    return %c0_i32, %c0_i32_0 : i32, i32
  }
  func.func @transform_3(%arg0: i32, %arg1: i32) -> (i32, i32) {
    %c0_i32 = arith.constant 0 : i32
    %c0_i32_0 = arith.constant 0 : i32
    %c0_i32_1 = arith.constant 0 : i32
    return %c0_i32, %c0_i32_0 : i32, i32
  }
  func.func @transform_4(%arg0: i32, %arg1: i32) -> (i32, i32) {
    %c0_i32 = arith.constant 0 : i32
    %c0_i32_0 = arith.constant 0 : i32
    %c0_i32_1 = arith.constant 0 : i32
    return %c0_i32, %c0_i32_0 : i32, i32
  }
  func.func @transform_5(%arg0: i32, %arg1: i32) -> (i32, i32) {
    %c0_i32 = arith.constant 0 : i32
    %c0_i32_0 = arith.constant 0 : i32
    %c0_i32_1 = arith.constant 0 : i32
    return %c0_i32, %c0_i32_0 : i32, i32
  }
  func.func @transform_6(%arg0: i32, %arg1: i32) -> (i32, i32) {
    %c0_i32 = arith.constant 0 : i32
    %c0_i32_0 = arith.constant 0 : i32
    %c0_i32_1 = arith.constant 0 : i32
    return %c0_i32, %c0_i32_0 : i32, i32
  }
  func.func @transform_7(%arg0: i32, %arg1: i32) -> (i32, i32) {
    %c1_i32 = arith.constant 1 : i32
    %0 = arith.muli %arg1, %c1_i32 : i32
    %1 = arith.addi %0, %arg0 : i32
    %c0_i32 = arith.constant 0 : i32
    %c0_i32_0 = arith.constant 0 : i32
    return %1, %c0_i32 : i32, i32
  }
}

</mosaic_0001>

<llo_original>
// kernel: _hallucinator_call.1
$region0: #{_hallucinator_call.1}
  #allocation0 [shape = 'u32[]', space=smem, size = 0x4, offset = 0x4, fixed_abs, tag = 'smem constant byte address 0x4 - core index']
  #allocation1 [shape = 'u32[72,128]{1,0:T(1,128)}', space=vmem, size = 0x9000, scoped, tag = 'internal scratch']
  %s0 = inlined_call_operand.hbm [shape: bf16[16,128], index: 0, kind: input, shape index: {}]
  %s1 = inlined_call_operand.hbm [shape: bf16[48,128], index: 1, kind: input, shape index: {}]
  %s2 = inlined_call_operand.hbm [shape: bf16[128,128], index: 2, kind: input, shape index: {}]
  %s3 = inlined_call_operand.hbm [shape: bf16[128,128], index: 3, kind: input, shape index: {}]
  %s4 = inlined_call_operand.vmem [shape: f32[1,128], index: 4, kind: input, shape index: {}]
  %s5 = inlined_call_operand.hbm [shape: bf16[128,128], index: 5, kind: input, shape index: {}]
  %s6 = inlined_call_operand.vmem [shape: f32[1,128], index: 6, kind: input, shape index: {}]
  %s7 = inlined_call_operand.hbm [shape: f32[48,128], index: 7, kind: output, shape index: {}]
  %s8 = sld [smem:[#allocation0]]
  $region81: #{_hallucinator_call.1} parent=0
    _
  %s10 = ssub.s32 1, %s8
  %s11 = scalar_select 0, %s10, %s8
  $region1: #{_hallucinator_call.1} parent=0
    #allocation2 [shape = 'u8[4096]{0}', space=vmem, size = 0x1000, scoped, tag = 'input window, operand 0, single buffered']
    #allocation3 [shape = 's32[2]{0}', space=sflag, size = 0x8, scoped, tag = 'scoped memory for _hallucinator_call.1']
    #allocation4 [shape = 's32[2]{0}', space=sflag, size = 0x8, scoped, tag = 'scoped memory for _hallucinator_call.1']
    #allocation5 [shape = 'u8[8192]{0}', space=vmem, size = 0x2000, scoped, tag = 'input window, operand 1']
    #allocation6 [shape = 's32[2]{0}', space=sflag, size = 0x8, scoped, tag = 'scoped memory for _hallucinator_call.1']
    #allocation7 [shape = 'u8[32768]{0}', space=vmem, size = 0x8000, scoped, tag = 'input window, operand 2, single buffered']
    #allocation8 [shape = 'u8[32768]{0}', space=vmem, size = 0x8000, scoped, tag = 'input window, operand 3, single buffered']
    #allocation9 [shape = 's32[1]{0}', space=sflag, size = 0x4, scoped, tag = 'scoped memory for _hallucinator_call.1']
    #allocation10 [shape = 'u8[32768]{0}', space=vmem, size = 0x8000, scoped, tag = 'input window, operand 5, single buffered']
    #allocation11 [shape = 'u8[16384]{0}', space=vmem, size = 0x4000, scoped, tag = 'output window, operand 0']
    %12 = vsyncpa [#allocation3], 0
    %13 = vsyncpa [#allocation6], 0
    %s14 = scalar_lea.sflag [#allocation6], 1
    %15 = vsyncpa %s14, 0
    %16 = vsyncpa [#allocation9], 0
    %17 = vsyncpa [#allocation4], 0
    %s18 = scalar_lea.sflag [#allocation4], 1
    %19 = vsyncpa %s18, 0
    loop: start=0, step=1, limit=5
    $region2: #{_hallucinator_call.1} parent=1 // loop_pre_header
      _
    $region3: #{_hallucinator_call.1} parent=1 // loop_header
      %s21 = sphi 0, %s25
      %p22 = scmp.ge.s32.totalorder %s21, 5
      %s28 = sphi 0, %s40
      %s29 = sphi 0, %s36
      %s30 = sphi 0, %s28
      %s31 = sphi 0, %s29
      %s32 = sphi 0, %s30
      %s33 = sphi 0, %s31
      %s43 = sphi 0, %s45
      %s46 = sphi 0, %s43
      %s47 = sphi 0, %s46
      %s63 = sphi 0, %s47
      %s71 = sphi 0, %s73
      %s74 = sphi 0, %s71
      %s75 = sphi 0, %s74
      %s91 = sphi 0, %s75
      %s95 = sphi 0, %s95
      %s97 = sphi 0, %s95
      %s98 = sphi 0, %s97
      %s112 = sphi 0, %s98
      %s116 = sphi 0, %s116
      %s118 = sphi 0, %s116
      %s119 = sphi 0, %s118
      %s133 = sphi 0, %s119
      %s137 = sphi 0, %s137
      %s139 = sphi 0, %s137
      %s140 = sphi 0, %s139
      %s154 = sphi 0, %s140
      %s158 = sphi 0, %s158
      %s160 = sphi 0, %s158
      %s161 = sphi 0, %s160
      %s175 = sphi 0, %s161
      %s179 = sphi 0, %s179
      %s181 = sphi 0, %s179
      %s182 = sphi 0, %s181
      %s196 = sphi 0, %s182
      %s204 = sphi 0, %s206
      %s207 = sphi 0, %s204
      %s208 = sphi 0, %s207
      %s224 = sphi 0, %s208
    $region4: #{_hallucinator_call.1} parent=1 // loop_header_branch
      %24 = sbr.rel (%p22) target = $region8
    $region5: #{_hallucinator_call.1} parent=1 // loop_body
      %s26 = ssub.s32 %s21, 1
      %s27 = ssub.s32 %s21, 2
      %s34 = sadd.s32 1, %s29
      %p35 = scmp.ge.s32.totalorder %s34, 3
      %s36 = scalar_select %p35, 0, %s34
      %s37 = sadd.s32 1, %s28
      %s38 = scalar_select %p35, %s37, %s28
      %p39 = scmp.ge.s32.totalorder %s38, 1
      %s40 = scalar_select %p39, 0, %s38
      %s41 = ssub.s32 %s28, %s40
      %p42 = scmp.eq.s32.totalorder %s41, 0
      %s44 = sadd.s32 %s43, 1
      %s45 = scalar_select %p42, %s43, %s44
      %p48 = pneg %p42
      %p49 = scmp.eq.s32.totalorder %s21, 2
      %p50 = por %p48, %p49
      %p51 = scmp.ne.s32.totalorder %s43, %s46
      %p52 = scmp.eq.s32.totalorder %s21, 0
      %p53 = por %p51, %p52
      %p54 = scmp.ne.s32.totalorder %s43, %s46
      %p55 = scmp.eq.s32.totalorder %s26, 2
      %p56 = por %p54, %p55
      %p57 = scmp.ne.s32.totalorder %s46, %s47
      %p58 = scmp.eq.s32.totalorder %s26, 0
      %p59 = por %p57, %p58
      %p60 = scmp.ne.s32.totalorder %s46, %s47
      %p61 = scmp.eq.s32.totalorder %s27, 2
      %p62 = por %p60, %p61
      %p64 = scmp.ne.s32.totalorder %s47, %s63
      %p65 = scmp.eq.s32.totalorder %s27, 0
      %p66 = por %p64, %p65
      %s67 = sadd.s32 %s29, %s28
      %s68 = sadd.s32 %s36, %s40
      %s69 = ssub.s32 %s67, %s68
      %p70 = scmp.eq.s32.totalorder %s69, 0
      %s72 = sadd.s32 %s71, 1
      %s73 = scalar_select %p70, %s71, %s72
      %p76 = pneg %p70
      %p77 = scmp.eq.s32.totalorder %s21, 2
      %p78 = por %p76, %p77
      %p79 = scmp.ne.s32.totalorder %s71, %s74
      %p80 = scmp.eq.s32.totalorder %s21, 0
      %p81 = por %p79, %p80
      %p82 = scmp.ne.s32.totalorder %s71, %s74
      %p83 = scmp.eq.s32.totalorder %s26, 2
      %p84 = por %p82, %p83
      %p85 = scmp.ne.s32.totalorder %s74, %s75
      %p86 = scmp.eq.s32.totalorder %s26, 0
      %p87 = por %p85, %p86
      %p88 = scmp.ne.s32.totalorder %s74, %s75
      %p89 = scmp.eq.s32.totalorder %s27, 2
      %p90 = por %p88, %p89
      %p92 = scmp.ne.s32.totalorder %s75, %s91
      %p93 = scmp.eq.s32.totalorder %s27, 0
      %p94 = por %p92, %p93
      %s96 = sadd.s32 %s95, 1
      %p99 = scmp.eq.s32.totalorder %s21, 2
      %p100 = scmp.ne.s32.totalorder %s95, %s97
      %p101 = scmp.eq.s32.totalorder %s21, 0
      %p102 = por %p100, %p101
      %p103 = scmp.ne.s32.totalorder %s95, %s97
      %p104 = scmp.eq.s32.totalorder %s26, 2
      %p105 = por %p103, %p104
      %p106 = scmp.ne.s32.totalorder %s97, %s98
      %p107 = scmp.eq.s32.totalorder %s26, 0
      %p108 = por %p106, %p107
      %p109 = scmp.ne.s32.totalorder %s97, %s98
      %p110 = scmp.eq.s32.totalorder %s27, 2
      %p111 = por %p109, %p110
      %p113 = scmp.ne.s32.totalorder %s98, %s112
      %p114 = scmp.eq.s32.totalorder %s27, 0
      %p115 = por %p113, %p114
      %s117 = sadd.s32 %s116, 1
      %p120 = scmp.eq.s32.totalorder %s21, 2
      %p121 = scmp.ne.s32.totalorder %s116, %s118
      %p122 = scmp.eq.s32.totalorder %s21, 0
      %p123 = por %p121, %p122
      %p124 = scmp.ne.s32.totalorder %s116, %s118
      %p125 = scmp.eq.s32.totalorder %s26, 2
      %p126 = por %p124, %p125
      %p127 = scmp.ne.s32.totalorder %s118, %s119
      %p128 = scmp.eq.s32.totalorder %s26, 0
      %p129 = por %p127, %p128
      %p130 = scmp.ne.s32.totalorder %s118, %s119
      %p131 = scmp.eq.s32.totalorder %s27, 2
      %p132 = por %p130, %p131
      %p134 = scmp.ne.s32.totalorder %s119, %s133
      %p135 = scmp.eq.s32.totalorder %s27, 0
      %p136 = por %p134, %p135
      %s138 = sadd.s32 %s137, 1
      %p141 = scmp.eq.s32.totalorder %s21, 2
      %p142 = scmp.ne.s32.totalorder %s137, %s139
      %p143 = scmp.eq.s32.totalorder %s21, 0
      %p144 = por %p142, %p143
      %p145 = scmp.ne.s32.totalorder %s137, %s139
      %p146 = scmp.eq.s32.totalorder %s26, 2
      %p147 = por %p145, %p146
      %p148 = scmp.ne.s32.totalorder %s139, %s140
      %p149 = scmp.eq.s32.totalorder %s26, 0
      %p150 = por %p148, %p149
      %p151 = scmp.ne.s32.totalorder %s139, %s140
      %p152 = scmp.eq.s32.totalorder %s27, 2
      %p153 = por %p151, %p152
      %p155 = scmp.ne.s32.totalorder %s140, %s154
      %p156 = scmp.eq.s32.totalorder %s27, 0
      %p157 = por %p155, %p156
      %s159 = sadd.s32 %s158, 1
      %p162 = scmp.eq.s32.totalorder %s21, 2
      %p163 = scmp.ne.s32.totalorder %s158, %s160
      %p164 = scmp.eq.s32.totalorder %s21, 0
      %p165 = por %p163, %p164
      %p166 = scmp.ne.s32.totalorder %s158, %s160
      %p167 = scmp.eq.s32.totalorder %s26, 2
      %p168 = por %p166, %p167
      %p169 = scmp.ne.s32.totalorder %s160, %s161
      %p170 = scmp.eq.s32.totalorder %s26, 0
      %p171 = por %p169, %p170
      %p172 = scmp.ne.s32.totalorder %s160, %s161
      %p173 = scmp.eq.s32.totalorder %s27, 2
      %p174 = por %p172, %p173
      %p176 = scmp.ne.s32.totalorder %s161, %s175
      %p177 = scmp.eq.s32.totalorder %s27, 0
      %p178 = por %p176, %p177
      %s180 = sadd.s32 %s179, 1
      %p183 = scmp.eq.s32.totalorder %s21, 2
      %p184 = scmp.ne.s32.totalorder %s179, %s181
      %p185 = scmp.eq.s32.totalorder %s21, 0
      %p186 = por %p184, %p185
      %p187 = scmp.ne.s32.totalorder %s179, %s181
      %p188 = scmp.eq.s32.totalorder %s26, 2
      %p189 = por %p187, %p188
      %p190 = scmp.ne.s32.totalorder %s181, %s182
      %p191 = scmp.eq.s32.totalorder %s26, 0
      %p192 = por %p190, %p191
      %p193 = scmp.ne.s32.totalorder %s181, %s182
      %p194 = scmp.eq.s32.totalorder %s27, 2
      %p195 = por %p193, %p194
      %p197 = scmp.ne.s32.totalorder %s182, %s196
      %p198 = scmp.eq.s32.totalorder %s27, 0
      %p199 = por %p197, %p198
      %s200 = sadd.s32 %s29, %s28
      %s201 = sadd.s32 %s36, %s40
      %s202 = ssub.s32 %s200, %s201
      %p203 = scmp.eq.s32.totalorder %s202, 0
      %s205 = sadd.s32 %s204, 1
      %s206 = scalar_select %p203, %s204, %s205
      %p209 = pneg %p203
      %p210 = scmp.eq.s32.totalorder %s21, 2
      %p211 = por %p209, %p210
      %p212 = scmp.ne.s32.totalorder %s204, %s207
      %p213 = scmp.eq.s32.totalorder %s21, 0
      %p214 = por %p212, %p213
      %p215 = scmp.ne.s32.totalorder %s204, %s207
      %p216 = scmp.eq.s32.totalorder %s26, 2
      %p217 = por %p215, %p216
      %p218 = scmp.ne.s32.totalorder %s207, %s208
      %p219 = scmp.eq.s32.totalorder %s26, 0
      %p220 = por %p218, %p219
      %p221 = scmp.ne.s32.totalorder %s207, %s208
      %p222 = scmp.eq.s32.totalorder %s27, 2
      %p223 = por %p221, %p222
      %p225 = scmp.ne.s32.totalorder %s208, %s224
      %p226 = scmp.eq.s32.totalorder %s27, 0
      %p227 = por %p225, %p226
      %p228 = scmp.le.s32.totalorder 1, %s21
      %p229 = scmp.lt.s32.totalorder %s21, 4
      %p230 = pnand %p228, %p229
      %p231 = pneg %p230
      // Predicated region
      $region9: #{_hallucinator_call.1} parent=5 // pred_check
        _
      $region10: #{_hallucinator_call.1} parent=5 // pred_check_branch
        %233 = sbr.rel (%p230) target = $region12
      $region11: #{_hallucinator_call.1} parent=5 // pred_region
        %s234 = ssub.s32 %s21, 1
        // Predicated region
        $region13: #{_hallucinator_call.1} parent=11 // pred_check
          %p235 = pneg %p59
        $region14: #{_hallucinator_call.1} parent=11 // pred_check_branch
          %237 = sbr.rel (%p235) target = $region16
        $region15: #{_hallucinator_call.1} parent=11 // pred_region
          %s238 = smul.u32 2, %s30
          %240 = vsyncadd [#allocation3], 0
          %s241 = smul.addr %s238, 4
          %s242 = scalar_lea.hbm %s0, %s241
          %s243 = sshll.u32 %s242, 4
          %s244 = int_to_ptr.hbm [resolvable:$true] %s243
          %s245 = sshll.u32 [#allocation2], 4
          %s246 = int_to_ptr.vmem [resolvable:$true] %s245
          %251 = dma.hbm_to_vmem [thread:$0]  %s244, 128, %s246, [#allocation3], 64, 64, 4
        $region16: #{_hallucinator_call.1} parent=11 // pred_fallthru
          _
        // Predicated region
        $region17: #{_hallucinator_call.1} parent=11 // pred_check
          %p252 = pneg %p108
        $region18: #{_hallucinator_call.1} parent=11 // pred_check_branch
          %254 = sbr.rel (%p252) target = $region20
        $region19: #{_hallucinator_call.1} parent=11 // pred_region
          %256 = vsyncadd [#allocation6], 0
          %s257 = sshll.u32 %s2, 4
          %s258 = int_to_ptr.hbm [resolvable:$true] %s257
          %s259 = sshll.u32 [#allocation7], 4
          %s260 = int_to_ptr.vmem [resolvable:$true] %s259
          %265 = dma.hbm_to_vmem [thread:$0]  %s258, 1024, %s260, [#allocation6], 64, 64, 4
        $region20: #{_hallucinator_call.1} parent=11 // pred_fallthru
          _
        // Predicated region
        $region21: #{_hallucinator_call.1} parent=11 // pred_check
          %p266 = pneg %p129
        $region22: #{_hallucinator_call.1} parent=11 // pred_check_branch
          %268 = sbr.rel (%p266) target = $region24
        $region23: #{_hallucinator_call.1} parent=11 // pred_region
          %270 = vsyncadd [#allocation9], 0
          %s271 = sshll.u32 %s3, 4
          %s272 = int_to_ptr.hbm [resolvable:$true] %s271
          %s273 = sshll.u32 [#allocation8], 4
          %s274 = int_to_ptr.vmem [resolvable:$true] %s273
          %279 = dma.hbm_to_vmem [thread:$0]  %s272, 1024, %s274, [#allocation9], 64, 64, 4
        $region24: #{_hallucinator_call.1} parent=11 // pred_fallthru
          _
        // Predicated region
        $region25: #{_hallucinator_call.1} parent=11 // pred_check
          %p280 = pneg %p150
        $region26: #{_hallucinator_call.1} parent=11 // pred_check_branch
          %282 = sbr.rel (%p280) target = $region28
        $region27: #{_hallucinator_call.1} parent=11 // pred_region
          _
        $region28: #{_hallucinator_call.1} parent=11 // pred_fallthru
          _
        // Predicated region
        $region29: #{_hallucinator_call.1} parent=11 // pred_check
          %p283 = pneg %p171
        $region30: #{_hallucinator_call.1} parent=11 // pred_check_branch
          %285 = sbr.rel (%p283) target = $region32
        $region31: #{_hallucinator_call.1} parent=11 // pred_region
          %287 = vsyncadd [#allocation9], 0
          %s288 = sshll.u32 %s5, 4
          %s289 = int_to_ptr.hbm [resolvable:$true] %s288
          %s290 = sshll.u32 [#allocation10], 4
          %s291 = int_to_ptr.vmem [resolvable:$true] %s290
          %296 = dma.hbm_to_vmem [thread:$0]  %s289, 1024, %s291, [#allocation9], 64, 64, 4
        $region32: #{_hallucinator_call.1} parent=11 // pred_fallthru
          _
        // Predicated region
        $region33: #{_hallucinator_call.1} parent=11 // pred_check
          %p297 = pneg %p192
        $region34: #{_hallucinator_call.1} parent=11 // pred_check_branch
          %299 = sbr.rel (%p297) target = $region36
        $region35: #{_hallucinator_call.1} parent=11 // pred_region
          _
        $region36: #{_hallucinator_call.1} parent=11 // pred_fallthru
          _
      $region12: #{_hallucinator_call.1} parent=5 // pred_fallthru
        _
      %p300 = scmp.lt.s32.totalorder %s21, 3
      // Predicated region
      $region37: #{_hallucinator_call.1} parent=5 // pred_check
        %p301 = pneg %p300
      $region38: #{_hallucinator_call.1} parent=5 // pred_check_branch
        %303 = sbr.rel (%p301) target = $region40
      $region39: #{_hallucinator_call.1} parent=5 // pred_region
        // Predicated region
        $region41: #{_hallucinator_call.1} parent=39 // pred_check
          %p304 = pneg %p81
        $region42: #{_hallucinator_call.1} parent=39 // pred_check_branch
          %306 = sbr.rel (%p304) target = $region44
        $region43: #{_hallucinator_call.1} parent=39 // pred_region
          %s307 = sand.u32 %s21, 1
          %s308 = scalar_lea.sflag [#allocation6], %s307
          %s309 = sand.u32 %s71, 1
          %s310 = smul.addr %s309, 8
          %s311 = scalar_lea.vmem [#allocation5], %s310
          %s312 = sadd.s32 %s29, %s28
          %s313 = smul.u32 2, %s312
          %315 = vsyncadd %s308, 0
          %s316 = smul.addr %s313, 4
          %s317 = scalar_lea.hbm %s1, %s316
          %s318 = sshll.u32 %s317, 4
          %s319 = int_to_ptr.hbm [resolvable:$true] %s318
          %s320 = sshll.u32 %s311, 4
          %s321 = int_to_ptr.vmem [resolvable:$true] %s320
          %326 = dma.hbm_to_vmem [thread:$0]  %s319, 128, %s321, %s308, 64, 64, 4
        $region44: #{_hallucinator_call.1} parent=39 // pred_fallthru
          _
      $region40: #{_hallucinator_call.1} parent=5 // pred_fallthru
        _
      %p327 = scmp.le.s32.totalorder 1, %s21
      %p328 = scmp.lt.s32.totalorder %s21, 4
      %p329 = pnand %p327, %p328
      %p330 = pneg %p329
      // Predicated region
      $region45: #{_hallucinator_call.1} parent=5 // pred_check
        _
      $region46: #{_hallucinator_call.1} parent=5 // pred_check_branch
        %332 = sbr.rel (%p329) target = $region48
      $region47: #{_hallucinator_call.1} parent=5 // pred_region
        %s333 = ssub.s32 %s21, 1
        // Predicated region
        $region49: #{_hallucinator_call.1} parent=47 // pred_check
          %p334 = pneg %p59
        $region50: #{_hallucinator_call.1} parent=47 // pred_check_branch
          %336 = sbr.rel (%p334) target = $region52
        $region51: #{_hallucinator_call.1} parent=47 // pred_region
          %338 = dma.done [#allocation3], 128
        $region52: #{_hallucinator_call.1} parent=47 // pred_fallthru
          _
        %s339 = sand.u32 %s26, 1
        %s340 = scalar_lea.sflag [#allocation6], %s339
        %s341 = sand.u32 %s74, 1
        %s342 = smul.addr %s341, 8
        %s343 = scalar_lea.vmem [#allocation5], %s342
        // Predicated region
        $region53: #{_hallucinator_call.1} parent=47 // pred_check
          %p344 = pneg %p87
        $region54: #{_hallucinator_call.1} parent=47 // pred_check_branch
          %346 = sbr.rel (%p344) target = $region56
        $region55: #{_hallucinator_call.1} parent=47 // pred_region
          %348 = dma.done %s340, 128
        $region56: #{_hallucinator_call.1} parent=47 // pred_fallthru
          _
        // Predicated region
        $region57: #{_hallucinator_call.1} parent=47 // pred_check
          %p349 = pneg %p108
        $region58: #{_hallucinator_call.1} parent=47 // pred_check_branch
          %351 = sbr.rel (%p349) target = $region60
        $region59: #{_hallucinator_call.1} parent=47 // pred_region
          %353 = dma.done [#allocation6], 1024
        $region60: #{_hallucinator_call.1} parent=47 // pred_fallthru
          _
        // Predicated region
        $region61: #{_hallucinator_call.1} parent=47 // pred_check
          %p354 = pneg %p129
        $region62: #{_hallucinator_call.1} parent=47 // pred_check_branch
          %356 = sbr.rel (%p354) target = $region64
        $region63: #{_hallucinator_call.1} parent=47 // pred_region
          %358 = dma.done [#allocation9], 1024
        $region64: #{_hallucinator_call.1} parent=47 // pred_fallthru
          _
        // Predicated region
        $region65: #{_hallucinator_call.1} parent=47 // pred_check
          %p359 = pneg %p171
        $region66: #{_hallucinator_call.1} parent=47 // pred_check_branch
          %361 = sbr.rel (%p359) target = $region68
        $region67: #{_hallucinator_call.1} parent=47 // pred_region
          %363 = dma.done [#allocation9], 1024
        $region68: #{_hallucinator_call.1} parent=47 // pred_fallthru
          _
        %p364 = pneg %p59
        %p365 = pneg %p56
        %s366 = sand.u32 %s26, 1
        %s367 = scalar_lea.sflag [#allocation6], %s366
        %s368 = sand.u32 %s74, 1
        %s369 = smul.addr %s368, 8
        %s370 = scalar_lea.vmem [#allocation5], %s369
        %p371 = pneg %p87
        %p372 = pneg %p84
        %p373 = pneg %p108
        %p374 = pneg %p105
        %p375 = pneg %p129
        %p376 = pneg %p126
        %p377 = pneg %p150
        %p378 = pneg %p147
        %p379 = pneg %p171
        %p380 = pneg %p168
        %p381 = pneg %p192
        %p382 = pneg %p189
        %p383 = pneg %p220
        %p384 = pneg %p217
        %s385 = sand.u32 %s207, 1
        %s386 = scalar_lea.sflag [#allocation4], %s385
        %s387 = sand.u32 %s207, 1
        %s388 = smul.addr %s387, 16
        %s389 = scalar_lea.vmem [#allocation11], %s388
        %s390 = smul.u32 2, %s30
        %s391 = sadd.s32 %s31, %s30
        %s392 = smul.u32 2, %s391
        %s393 = sadd.s32 %s31, %s30
        %s394 = smul.u32 2, %s393
        %v395 = vld [vmem:[#allocation2] sm:$0xf]
        %v396 = vld [vmem:[#allocation2 + $0x4] sm:$0xf]
        %v397 = vld [vmem:[#allocation7] sm:$0xf]
        %v398 = vld [vmem:[#allocation7 + $0x4] sm:$0xf]
        %v399 = vld [vmem:[#allocation7 + $0x8] sm:$0xf]
        %v400 = vld [vmem:[#allocation7 + $0xc] sm:$0xf]
        %v401 = vld [vmem:[#allocation7 + $0x10] sm:$0xf]
        %v402 = vld [vmem:[#allocation7 + $0x14] sm:$0xf]
        %v403 = vld [vmem:[#allocation7 + $0x18] sm:$0xf]
        %v404 = vld [vmem:[#allocation7 + $0x1c] sm:$0xf]
        %v405 = vld [vmem:[#allocation7 + $0x20] sm:$0xf]
        %v406 = vld [vmem:[#allocation7 + $0x24] sm:$0xf]
        %v407 = vld [vmem:[#allocation7 + $0x28] sm:$0xf]
        %v408 = vld [vmem:[#allocation7 + $0x2c] sm:$0xf]
        %v409 = vld [vmem:[#allocation7 + $0x30] sm:$0xf]
        %v410 = vld [vmem:[#allocation7 + $0x34] sm:$0xf]
        %v411 = vld [vmem:[#allocation7 + $0x38] sm:$0xf]
        %v412 = vld [vmem:[#allocation7 + $0x3c] sm:$0xf]
        %v413 = vld [vmem:[%s343] sm:$0xf]
        %v414 = vld [vmem:[%s343 + $0x4] sm:$0xf]
        %v415 = vld [vmem:[#allocation8] sm:$0xf]
        %v416 = vld [vmem:[#allocation8 + $0x4] sm:$0xf]
        %v417 = vld [vmem:[#allocation8 + $0x8] sm:$0xf]
        %v418 = vld [vmem:[#allocation8 + $0xc] sm:$0xf]
        %v419 = vld [vmem:[#allocation8 + $0x10] sm:$0xf]
        %v420 = vld [vmem:[#allocation8 + $0x14] sm:$0xf]
        %v421 = vld [vmem:[#allocation8 + $0x18] sm:$0xf]
        %v422 = vld [vmem:[#allocation8 + $0x1c] sm:$0xf]
        %v423 = vld [vmem:[#allocation8 + $0x20] sm:$0xf]
        %v424 = vld [vmem:[#allocation8 + $0x24] sm:$0xf]
        %v425 = vld [vmem:[#allocation8 + $0x28] sm:$0xf]
        %v426 = vld [vmem:[#allocation8 + $0x2c] sm:$0xf]
        %v427 = vld [vmem:[#allocation8 + $0x30] sm:$0xf]
        %v428 = vld [vmem:[#allocation8 + $0x34] sm:$0xf]
        %v429 = vld [vmem:[#allocation8 + $0x38] sm:$0xf]
        %v430 = vld [vmem:[#allocation8 + $0x3c] sm:$0xf]
        %v433 = vunpack.c.l.b16 %v413
        %v434 = vunpack.c.l.b16 %v414
        %v435 = vpack.c.b16 %v434, %v433
        %v453 = vunpack.c.l.b16 %v415
        %v454 = vunpack.c.l.b16 %v416
        %v455 = vunpack.c.l.b16 %v417
        %v456 = vunpack.c.l.b16 %v418
        %v457 = vunpack.c.l.b16 %v419
        %v458 = vunpack.c.l.b16 %v420
        %v459 = vunpack.c.l.b16 %v421
        %v460 = vunpack.c.l.b16 %v422
        %v461 = vunpack.c.l.b16 %v423
        %v462 = vunpack.c.l.b16 %v424
        %v463 = vunpack.c.l.b16 %v425
        %v464 = vunpack.c.l.b16 %v426
        %v465 = vunpack.c.l.b16 %v427
        %v466 = vunpack.c.l.b16 %v428
        %v467 = vunpack.c.l.b16 %v429
        %v468 = vunpack.c.l.b16 %v430
        %v469 = vpack.c.b16 %v454, %v453
        %v470 = vpack.c.b16 %v456, %v455
        %v471 = vpack.c.b16 %v458, %v457
        %v472 = vpack.c.b16 %v460, %v459
        %v473 = vpack.c.b16 %v462, %v461
        %v474 = vpack.c.b16 %v464, %v463
        %v475 = vpack.c.b16 %v466, %v465
        %v476 = vpack.c.b16 %v468, %v467
        %485 = vmatpush.bf16.msra.mxu0 %v476
        %486 = vmatpush.bf16.msra.mxu0 %v475
        %487 = vmatpush.bf16.msra.mxu0 %v474
        %488 = vmatpush.bf16.msra.mxu0 %v473
        %489 = vmatpush.bf16.msra.mxu0 %v472
        %490 = vmatpush.bf16.msra.mxu0 %v471
        %491 = vmatpush.bf16.msra.mxu0 %v470
        %492 = vmatpush.bf16.msra.mxu0 %v469
        %493 = vmatmul.bf16.gmra.mxu0 %v435
        %v494 = vpop.f32.mrf.mxu0
        %v495 = vadd.f32 0.0, %v494
        %v496 = vpop.f32.mrf.mxu0
        %v497 = vadd.f32 0.0, %v496
        %498 = vdwg.mxu0
        %v501 = vunpack.c.l.b16 %v395
        %v502 = vunpack.c.l.b16 %v396
        %v503 = vpack.c.b16 %v502, %v501
        %v521 = vunpack.c.l.b16 %v397
        %v522 = vunpack.c.l.b16 %v398
        %v523 = vunpack.c.l.b16 %v399
        %v524 = vunpack.c.l.b16 %v400
        %v525 = vunpack.c.l.b16 %v401
        %v526 = vunpack.c.l.b16 %v402
        %v527 = vunpack.c.l.b16 %v403
        %v528 = vunpack.c.l.b16 %v404
        %v529 = vunpack.c.l.b16 %v405
        %v530 = vunpack.c.l.b16 %v406
        %v531 = vunpack.c.l.b16 %v407
        %v532 = vunpack.c.l.b16 %v408
        %v533 = vunpack.c.l.b16 %v409
        %v534 = vunpack.c.l.b16 %v410
        %v535 = vunpack.c.l.b16 %v411
        %v536 = vunpack.c.l.b16 %v412
        %v537 = vpack.c.b16 %v522, %v521
        %v538 = vpack.c.b16 %v524, %v523
        %v539 = vpack.c.b16 %v526, %v525
        %v540 = vpack.c.b16 %v528, %v527
        %v541 = vpack.c.b16 %v530, %v529
        %v542 = vpack.c.b16 %v532, %v531
        %v543 = vpack.c.b16 %v534, %v533
        %v544 = vpack.c.b16 %v536, %v535
        %553 = vmatpush.bf16.msra.mxu0 %v544
        %554 = vmatpush.bf16.msra.mxu0 %v543
        %555 = vmatpush.bf16.msra.mxu0 %v542
        %556 = vmatpush.bf16.msra.mxu0 %v541
        %557 = vmatpush.bf16.msra.mxu0 %v540
        %558 = vmatpush.bf16.msra.mxu0 %v539
        %559 = vmatpush.bf16.msra.mxu0 %v538
        %560 = vmatpush.bf16.msra.mxu0 %v537
        %561 = vmatmul.bf16.gmra.mxu0 %v503
        %v562 = vpop.f32.mrf.mxu0
        %v563 = vadd.f32 %v495, %v562
        %v564 = vpop.f32.mrf.mxu0
        %v565 = vadd.f32 %v497, %v564
        %566 = vdwg.mxu0
        %v567 = vld [vmem:[%s4] sm:$0x1]
        %v569 = vperm.slane %v567, 0
        %v571 = vadd.f32 %v563, %v569
        %v572 = vadd.f32 %v565, %v569
        %v573 = vmax.f32 %v571, 0.0
        %v574 = vmax.f32 %v572, 0.0
        %v575 = vpack.c.bf16 %v574, %v573
        %v576 = vld [vmem:[#allocation10] sm:$0xf]
        %v577 = vld [vmem:[#allocation10 + $0x4] sm:$0xf]
        %v578 = vld [vmem:[#allocation10 + $0x8] sm:$0xf]
        %v579 = vld [vmem:[#allocation10 + $0xc] sm:$0xf]
        %v580 = vld [vmem:[#allocation10 + $0x10] sm:$0xf]
        %v581 = vld [vmem:[#allocation10 + $0x14] sm:$0xf]
        %v582 = vld [vmem:[#allocation10 + $0x18] sm:$0xf]
        %v583 = vld [vmem:[#allocation10 + $0x1c] sm:$0xf]
        %v584 = vld [vmem:[#allocation10 + $0x20] sm:$0xf]
        %v585 = vld [vmem:[#allocation10 + $0x24] sm:$0xf]
        %v586 = vld [vmem:[#allocation10 + $0x28] sm:$0xf]
        %v587 = vld [vmem:[#allocation10 + $0x2c] sm:$0xf]
        %v588 = vld [vmem:[#allocation10 + $0x30] sm:$0xf]
        %v589 = vld [vmem:[#allocation10 + $0x34] sm:$0xf]
        %v590 = vld [vmem:[#allocation10 + $0x38] sm:$0xf]
        %v591 = vld [vmem:[#allocation10 + $0x3c] sm:$0xf]
        %v592 = vld [vmem:[%s6] sm:$0x1]
        %v594 = vperm.slane %v592, 0
        %v612 = vunpack.c.l.b16 %v576
        %v613 = vunpack.c.l.b16 %v577
        %v614 = vunpack.c.l.b16 %v578
        %v615 = vunpack.c.l.b16 %v579
        %v616 = vunpack.c.l.b16 %v580
        %v617 = vunpack.c.l.b16 %v581
        %v618 = vunpack.c.l.b16 %v582
        %v619 = vunpack.c.l.b16 %v583
        %v620 = vunpack.c.l.b16 %v584
        %v621 = vunpack.c.l.b16 %v585
        %v622 = vunpack.c.l.b16 %v586
        %v623 = vunpack.c.l.b16 %v587
        %v624 = vunpack.c.l.b16 %v588
        %v625 = vunpack.c.l.b16 %v589
        %v626 = vunpack.c.l.b16 %v590
        %v627 = vunpack.c.l.b16 %v591
        %v628 = vpack.c.b16 %v613, %v612
        %v629 = vpack.c.b16 %v615, %v614
        %v630 = vpack.c.b16 %v617, %v616
        %v631 = vpack.c.b16 %v619, %v618
        %v632 = vpack.c.b16 %v621, %v620
        %v633 = vpack.c.b16 %v623, %v622
        %v634 = vpack.c.b16 %v625, %v624
        %v635 = vpack.c.b16 %v627, %v626
        %644 = vmatpush.bf16.msra.mxu0 %v635
        %645 = vmatpush.bf16.msra.mxu0 %v634
        %646 = vmatpush.bf16.msra.mxu0 %v633
        %647 = vmatpush.bf16.msra.mxu0 %v632
        %648 = vmatpush.bf16.msra.mxu0 %v631
        %649 = vmatpush.bf16.msra.mxu0 %v630
        %650 = vmatpush.bf16.msra.mxu0 %v629
        %651 = vmatpush.bf16.msra.mxu0 %v628
        %652 = vmatmul.bf16.gmra.mxu0 %v575
        %v653 = vpop.f32.mrf.mxu0
        %v654 = vadd.f32 %v594, %v653
        %v655 = vpop.f32.mrf.mxu0
        %v656 = vadd.f32 %v594, %v655
        %657 = vdwg.mxu0
        %v658 = vmax.f32 %v654, 0.0
        %v659 = vmax.f32 %v656, 0.0
        %660 = vst [vmem:[%s389] sm:$0xff] %v658
        %661 = vst [vmem:[%s389 + $0x8] sm:$0xff] %v659
        %s662 = sand.u32 %s207, 1
        %s663 = scalar_lea.sflag [#allocation4], %s662
        %s664 = sand.u32 %s207, 1
        %s665 = smul.addr %s664, 16
        %s666 = scalar_lea.vmem [#allocation11], %s665
        // Predicated region
        $region69: #{_hallucinator_call.1} parent=47 // pred_check
          %p667 = pneg %p217
        $region70: #{_hallucinator_call.1} parent=47 // pred_check_branch
          %669 = sbr.rel (%p667) target = $region72
        $region71: #{_hallucinator_call.1} parent=47 // pred_region
          %s670 = sadd.s32 %s31, %s30
          %s671 = smul.u32 2, %s670
          %673 = vsyncadd %s663, 0
          %s674 = smul.addr %s671, 8
          %s675 = scalar_lea.hbm %s7, %s674
          %s676 = sshll.u32 %s666, 4
          %s677 = int_to_ptr.vmem [resolvable:$true] %s676
          %s678 = sshll.u32 %s675, 4
          %s679 = int_to_ptr.hbm [resolvable:$true] %s678
          %684 = dma.vmem_to_hbm [thread:$0]  %s677, 256, %s679, %s663, 128, 128, 8
        $region72: #{_hallucinator_call.1} parent=47 // pred_fallthru
          _
      $region48: #{_hallucinator_call.1} parent=5 // pred_fallthru
        _
      %p685 = scmp.le.s32.totalorder 2, %s21
      // Predicated region
      $region73: #{_hallucinator_call.1} parent=5 // pred_check
        %p686 = pneg %p685
      $region74: #{_hallucinator_call.1} parent=5 // pred_check_branch
        %688 = sbr.rel (%p686) target = $region76
      $region75: #{_hallucinator_call.1} parent=5 // pred_region
        %s689 = ssub.s32 %s21, 2
        // Predicated region
        $region77: #{_hallucinator_call.1} parent=75 // pred_check
          %p690 = pneg %p223
        $region78: #{_hallucinator_call.1} parent=75 // pred_check_branch
          %692 = sbr.rel (%p690) target = $region80
        $region79: #{_hallucinator_call.1} parent=75 // pred_region
          %s693 = sand.u32 %s208, 1
          %s694 = scalar_lea.sflag [#allocation4], %s693
          %s695 = sand.u32 %s208, 1
          %s696 = smul.addr %s695, 16
          %s697 = scalar_lea.vmem [#allocation11], %s696
          %699 = dma.done %s694, 256
        $region80: #{_hallucinator_call.1} parent=75 // pred_fallthru
          _
      $region76: #{_hallucinator_call.1} parent=5 // pred_fallthru
        _
    $region6: #{_hallucinator_call.1} parent=1 // loop_footer
      %s25 = sadd.s32 1, %s21
    $region7: #{_hallucinator_call.1} parent=1 // loop_footer_branch
      %20 = sbr.rel target = $region3
    $region8: #{_hallucinator_call.1} parent=1 // loop_exit
      _
    %700 = vsyncpa [#allocation3], 1
    %s701 = scalar_lea.sflag [#allocation3], 1
    %702 = vsyncpa %s701, 1
    %703 = vsyncpa [#allocation6], 1
    %s704 = scalar_lea.sflag [#allocation6], 1
    %705 = vsyncpa %s704, 1
    %706 = vsyncpa [#allocation9], 1
    %707 = vsyncpa [#allocation4], 1
    %s708 = scalar_lea.sflag [#allocation4], 1
    %709 = vsyncpa %s708, 1

</llo_original>
